<compile_context>
chip_gen: v5e
topology: v5e:2x2
jax: 0.10.0
libtpu: 0.0.40
codegen_flags: <defaults>
</compile_context>

<pallas_src>
import functools

import jax
import jax.numpy as jnp
from jax import lax
from jax.experimental import pallas as pl
from jax.experimental.pallas import tpu as pltpu

KERNEL_SIZE = 7
PAD = KERNEL_SIZE // 2


def _spatial_attention_kernel(w_ref, b_ref, x_ref, o_ref, *, fuse):
    # w_ref : SMEM (2, KERNEL_SIZE) float32  -- Conv1d weight (out-ch squeezed)
    # b_ref : SMEM (1,)             float32  -- Conv1d bias
    # x_ref : VMEM block (bt, C, L)
    # o_ref : VMEM block (bt, L)    [map]   or (bt, C, L)   [fused]
    bt, _, L = x_ref.shape

    # Channel reductions.  max is order/dtype exact -> reduce then cast;
    # mean accumulates in f32 (the f32 cast's live range ends here, so it does
    # not inflate the working set through the conv below).
    maxv = jnp.max(x_ref[...], axis=1).astype(jnp.float32)        # (bt, L)
    avgv = jnp.mean(x_ref[...].astype(jnp.float32), axis=1)       # (bt, L)

    # Lane index, used to zero the circular-wrap region of each roll so the
    # result matches Conv1d's zero padding.
    lane = lax.broadcasted_iota(jnp.int32, (bt, L), 1)

    # Conv1d(2 -> 1, k=7, pad=3): statically unrolled taps on the VPU, shifts
    # via the XLU (pltpu.roll, idle slot here).  Center tap needs no mask;
    # shifted taps use one single-sided compare + one select on the combined
    # (max + avg) contribution.
    acc = w_ref[0, PAD] * maxv + w_ref[1, PAD] * avgv + b_ref[0]
    for d in range(-PAD, PAD + 1):
        if d == 0:
            continue
        k = d + PAD                                    # tap index in [0, 7)
        s = (-d) % L                                   # rolled[l] = src[l + d]
        tap = (w_ref[0, k] * pltpu.roll(maxv, s, 1)    # channel 0 = max
               + w_ref[1, k] * pltpu.roll(avgv, s, 1)) # channel 1 = avg
        valid = (lane < L - d) if d > 0 else (lane >= -d)
        acc = acc + jnp.where(valid, tap, 0.0)

    att = jax.nn.sigmoid(acc)                          # (bt, L), f32

    if fuse:
        # Fused CBAM step: x * attention map, straight from the native-dtype
        # block (no second HBM read of x, no f32 copy held live).
        o_ref[...] = x_ref[...] * att[:, None, :].astype(o_ref.dtype)
    else:
        o_ref[...] = att.astype(o_ref.dtype)


def _device_defaults():
    """(target_block_bytes, vmem_limit_bytes) per TPU generation."""
    kind = ""
    try:
        kind = jax.devices()[0].device_kind.lower()
    except Exception:  # pragma: no cover - defensive; fall through to default
        pass
    if "v7" in kind:
        # v7x: 64 MiB physical VMEM/TC, ~3.2 TB/s HBM.
        return 8 * 1024 * 1024, 48 * 1024 * 1024
    if "v5" in kind or "v6" in kind:
        # v5e/v6e: 128 MiB physical VMEM (scoped default is only 16/32 MiB).
        return 16 * 1024 * 1024, 96 * 1024 * 1024
    # Unknown chip: budget that is safe even on v7x's 64 MiB VMEM.
    return 8 * 1024 * 1024, 48 * 1024 * 1024


def _pick_batch_tile(B, C, L, itemsize, target_bytes):
    """Rows of x per grid step.

    Sized so a (bt, C, L) block is ~target_bytes, then snapped so the 2-D
    (bt, L) output block stays sublane-dense (bt % 8 == 0) or covers the whole
    batch (bt == B) -- avoiding masked vst / padded writeback.
    """
    row_bytes = max(1, C * L * itemsize)
    bt = max(1, target_bytes // row_bytes)
    if bt >= B:
        # Whole batch fits one block.  Split in two (so both v7x TensorCores
        # take work) only when the halves remain sublane-dense.
        half = -(-B // 2)                              # ceil(B / 2)
        if B >= 16 and half % 8 == 0:
            return half
        return B
    if bt >= 8:
        bt -= bt % 8                                   # keep output dense
    return int(min(bt, B))


def spatial_attention(x, weight, bias, *, fuse_multiply=False,
                      target_block_bytes=None, vmem_limit_bytes=None,
                      donate_x=False):
    """x: (B, C, L); weight: (2, KERNEL_SIZE); bias: (1,).

    Returns sigmoid(Conv1d([max_c(x); mean_c(x)])) of shape (B, 1, L), or
    x * that map (shape (B, C, L)) if fuse_multiply=True.  Output dtype
    follows x.dtype.  Set donate_x=True (fused path only) to alias the output
    onto x's buffer when the caller no longer needs x.
    """
    B, C, L = x.shape
    weight = jnp.asarray(weight, jnp.float32).reshape(2, KERNEL_SIZE)
    bias = jnp.asarray(bias, jnp.float32).reshape(1)

    tb_default, vl_default = _device_defaults()
    if target_block_bytes is None:
        target_block_bytes = tb_default
    if vmem_limit_bytes is None:
        vmem_limit_bytes = vl_default

    itemsize = jnp.dtype(x.dtype).itemsize
    bt = _pick_batch_tile(B, C, L, itemsize, target_block_bytes)
    grid = (pl.cdiv(B, bt),)

    if fuse_multiply:
        out_shape = jax.ShapeDtypeStruct((B, C, L), x.dtype)
        out_spec = pl.BlockSpec((bt, C, L), lambda i: (i, 0, 0))
        out_bytes = B * C * L * itemsize
        extra_flops = B * C * L                        # fused multiply
    else:
        # Dense 2-D output slab (reshaped to (B, 1, L) below): unmasked vst
        # and contiguous HBM writeback instead of size-1-sublane tiles.
        out_shape = jax.ShapeDtypeStruct((B, L), x.dtype)
        out_spec = pl.BlockSpec((bt, L), lambda i: (i, 0))
        out_bytes = B * L * itemsize
        extra_flops = 0

    cost = pl.CostEstimate(
        flops=2 * B * C * L + 30 * B * L + extra_flops,  # reductions + 7-tap conv
        transcendentals=B * L,                           # sigmoid
        bytes_accessed=B * C * L * itemsize + out_bytes)

    kernel = functools.partial(_spatial_attention_kernel, fuse=fuse_multiply)
    io_aliases = {2: 0} if (fuse_multiply and donate_x) else {}

    out = pl.pallas_call(
        kernel,
        out_shape=out_shape,
        grid=grid,
        in_specs=[
            pl.BlockSpec(memory_space=pltpu.MemorySpace.SMEM),   # weight
            pl.BlockSpec(memory_space=pltpu.MemorySpace.SMEM),   # bias
            pl.BlockSpec((bt, C, L), lambda i: (i, 0, 0)),       # x
        ],
        out_specs=out_spec,
        compiler_params=pltpu.CompilerParams(
            dimension_semantics=("parallel",),
            vmem_limit_bytes=vmem_limit_bytes),
        cost_estimate=cost,
        input_output_aliases=io_aliases,
    )(weight, bias, x)

    if fuse_multiply:
        return out
    return out.reshape(B, 1, L)


def reference(x, weight, bias):
    """Pure-JAX reference (lax conv) for correctness checking."""
    xf = x.astype(jnp.float32)
    maxv = jnp.max(xf, axis=-2, keepdims=True)
    avgv = jnp.mean(xf, axis=-2, keepdims=True)
    cat = jnp.concatenate([maxv, avgv], axis=-2)                 # (B, 2, L)
    w = weight.reshape(1, 2, KERNEL_SIZE).astype(jnp.float32)    # (O, I, K)
    out = lax.conv_general_dilated(
        cat, w, window_strides=(1,), padding=[(PAD, PAD)],
        dimension_numbers=("NCH", "OIH", "NCH"))
    return jax.nn.sigmoid(out + bias.reshape(1, 1, 1).astype(jnp.float32))


if __name__ == "__main__":
    key = jax.random.PRNGKey(0)
    k_x, k_w, k_b = jax.random.split(key, 3)

    B, C, L = 2, 4, 128
    x = jax.random.normal(k_x, (B, C, L), dtype=jnp.float32)

    # Deterministic Conv1d(2, 1, k=7) init (PyTorch-style uniform bounds,
    # fan_in = 2 * 7 = 14).
    fan_in = 2 * KERNEL_SIZE
    bound = 1.0 / (fan_in ** 0.5)
    weight = jax.random.uniform(k_w, (2, KERNEL_SIZE),
                                minval=-bound, maxval=bound, dtype=jnp.float32)
    bias = jax.random.uniform(k_b, (1,),
                              minval=-bound, maxval=bound, dtype=jnp.float32)

    ref = reference(x, weight, bias)

    # 1) Module semantics: attention map (B, 1, L).
    out = jax.block_until_ready(spatial_attention(x, weight, bias))
    assert out.shape == (B, 1, L)
    assert jnp.allclose(out, ref, atol=1e-5, rtol=1e-5), "map mismatch"

    # 2) Fused CBAM variant: x * map (B, C, L) in one pass over x.
    out_fused = jax.block_until_ready(
        spatial_attention(x, weight, bias, fuse_multiply=True))
    assert out_fused.shape == (B, C, L)
    assert jnp.allclose(out_fused, x * ref, atol=1e-5, rtol=1e-5), \
        "fused mismatch"

    # 3) bf16 input path (half the HBM read bytes; compute stays f32).
    x_bf16 = x.astype(jnp.bfloat16)
    out_bf16 = jax.block_until_ready(spatial_attention(x_bf16, weight, bias))
    ref_bf16 = reference(x_bf16, weight, bias)
    assert out_bf16.shape == (B, 1, L)
    assert jnp.allclose(out_bf16.astype(jnp.float32), ref_bf16,
                        atol=2e-2, rtol=2e-2), "bf16 mismatch"

    print("KERNEL_OK")
</pallas_src>

<mosaic_0001>
module attributes {stable_mosaic.version = 11 : i64} {
  func.func @_spatial_attention_kernel(%arg0: i32, %arg1: memref<2x7xf32, #tpu.memory_space<smem>>, %arg2: memref<1xf32, #tpu.memory_space<smem>>, %arg3: memref<2x4x128xf32, #tpu.memory_space<vmem>>, %arg4: memref<2x128xf32, #tpu.memory_space<vmem>>) attributes {dimension_semantics = [#tpu.dimension_semantics<parallel>], iteration_bounds = array<i64: 1>, scalar_prefetch = 0 : i64, scratch_operands = 0 : i64, tpu.core_type = #tpu.core_type<tc>, window_params = [{transform_indices = @transform_0, window_bounds = array<i64: 2, 7>}, {transform_indices = @transform_1, window_bounds = array<i64: 1>}, {transform_indices = @transform_2, window_bounds = array<i64: 2, 4, 128>}, {transform_indices = @transform_3, window_bounds = array<i64: 2, 128>}]} {
    %c0 = arith.constant 0 : index
    %c0_0 = arith.constant 0 : index
    %c0_1 = arith.constant 0 : index
    %0 = vector.load %arg3[%c0, %c0_0, %c0_1] : memref<2x4x128xf32, #tpu.memory_space<vmem>>, vector<2x4x128xf32>
    %cst = arith.constant dense<0xFF800000> : vector<2x128xf32>
    %1 = vector.multi_reduction <maximumf>, %0, %cst [1] : vector<2x4x128xf32> to vector<2x128xf32>
    %c0_2 = arith.constant 0 : index
    %c0_3 = arith.constant 0 : index
    %c0_4 = arith.constant 0 : index
    %2 = vector.load %arg3[%c0_2, %c0_3, %c0_4] : memref<2x4x128xf32, #tpu.memory_space<vmem>>, vector<2x4x128xf32>
    %cst_5 = arith.constant dense<0.000000e+00> : vector<2x128xf32>
    %3 = vector.multi_reduction <add>, %2, %cst_5 [1] : vector<2x4x128xf32> to vector<2x128xf32>
    %cst_6 = arith.constant 4.000000e+00 : f32
    %4 = vector.broadcast %cst_6 : f32 to vector<2x128xf32>
    %5 = arith.divf %3, %4 : vector<2x128xf32>
    %6 = tpu.iota {dimensions = array<i32: 1>} : vector<2x128xi32>
    %c0_7 = arith.constant 0 : index
    %c3 = arith.constant 3 : index
    %7 = memref.load %arg1[%c0_7, %c3] : memref<2x7xf32, #tpu.memory_space<smem>>
    %8 = vector.broadcast %7 : f32 to vector<2x128xf32>
    %9 = arith.mulf %8, %1 : vector<2x128xf32>
    %c1 = arith.constant 1 : index
    %c3_8 = arith.constant 3 : index
    %10 = memref.load %arg1[%c1, %c3_8] : memref<2x7xf32, #tpu.memory_space<smem>>
    %11 = vector.broadcast %10 : f32 to vector<2x128xf32>
    %12 = arith.mulf %11, %5 : vector<2x128xf32>
    %13 = arith.addf %9, %12 : vector<2x128xf32>
    %c0_9 = arith.constant 0 : index
    %14 = memref.load %arg2[%c0_9] : memref<1xf32, #tpu.memory_space<smem>>
    %15 = vector.broadcast %14 : f32 to vector<2x128xf32>
    %16 = arith.addf %13, %15 : vector<2x128xf32>
    %c0_10 = arith.constant 0 : index
    %c0_11 = arith.constant 0 : index
    %17 = memref.load %arg1[%c0_10, %c0_11] : memref<2x7xf32, #tpu.memory_space<smem>>
    %c3_i32 = arith.constant 3 : i32
    %18 = tpu.dynamic_rotate %1 by %c3_i32 dim 1 : vector<2x128xf32>, i32 -> vector<2x128xf32>
    %19 = vector.broadcast %17 : f32 to vector<2x128xf32>
    %20 = arith.mulf %19, %18 : vector<2x128xf32>
    %c1_12 = arith.constant 1 : index
    %c0_13 = arith.constant 0 : index
    %21 = memref.load %arg1[%c1_12, %c0_13] : memref<2x7xf32, #tpu.memory_space<smem>>
    %c3_i32_14 = arith.constant 3 : i32
    %22 = tpu.dynamic_rotate %5 by %c3_i32_14 dim 1 : vector<2x128xf32>, i32 -> vector<2x128xf32>
    %23 = vector.broadcast %21 : f32 to vector<2x128xf32>
    %24 = arith.mulf %23, %22 : vector<2x128xf32>
    %25 = arith.addf %20, %24 : vector<2x128xf32>
    %c3_i32_15 = arith.constant 3 : i32
    %26 = vector.broadcast %c3_i32_15 : i32 to vector<2x128xi32>
    %27 = arith.cmpi sge, %6, %26 : vector<2x128xi32>
    %cst_16 = arith.constant 0.000000e+00 : f32
    %28 = vector.broadcast %cst_16 : f32 to vector<2x128xf32>
    %29 = arith.select %27, %25, %28 : vector<2x128xi1>, vector<2x128xf32>
    %30 = arith.addf %16, %29 : vector<2x128xf32>
    %c0_17 = arith.constant 0 : index
    %c1_18 = arith.constant 1 : index
    %31 = memref.load %arg1[%c0_17, %c1_18] : memref<2x7xf32, #tpu.memory_space<smem>>
    %c2_i32 = arith.constant 2 : i32
    %32 = tpu.dynamic_rotate %1 by %c2_i32 dim 1 : vector<2x128xf32>, i32 -> vector<2x128xf32>
    %33 = vector.broadcast %31 : f32 to vector<2x128xf32>
    %34 = arith.mulf %33, %32 : vector<2x128xf32>
    %c1_19 = arith.constant 1 : index
    %c1_20 = arith.constant 1 : index
    %35 = memref.load %arg1[%c1_19, %c1_20] : memref<2x7xf32, #tpu.memory_space<smem>>
    %c2_i32_21 = arith.constant 2 : i32
    %36 = tpu.dynamic_rotate %5 by %c2_i32_21 dim 1 : vector<2x128xf32>, i32 -> vector<2x128xf32>
    %37 = vector.broadcast %35 : f32 to vector<2x128xf32>
    %38 = arith.mulf %37, %36 : vector<2x128xf32>
    %39 = arith.addf %34, %38 : vector<2x128xf32>
    %c2_i32_22 = arith.constant 2 : i32
    %40 = vector.broadcast %c2_i32_22 : i32 to vector<2x128xi32>
    %41 = arith.cmpi sge, %6, %40 : vector<2x128xi32>
    %cst_23 = arith.constant 0.000000e+00 : f32
    %42 = vector.broadcast %cst_23 : f32 to vector<2x128xf32>
    %43 = arith.select %41, %39, %42 : vector<2x128xi1>, vector<2x128xf32>
    %44 = arith.addf %30, %43 : vector<2x128xf32>
    %c0_24 = arith.constant 0 : index
    %c2 = arith.constant 2 : index
    %45 = memref.load %arg1[%c0_24, %c2] : memref<2x7xf32, #tpu.memory_space<smem>>
    %c1_i32 = arith.constant 1 : i32
    %46 = tpu.dynamic_rotate %1 by %c1_i32 dim 1 : vector<2x128xf32>, i32 -> vector<2x128xf32>
    %47 = vector.broadcast %45 : f32 to vector<2x128xf32>
    %48 = arith.mulf %47, %46 : vector<2x128xf32>
    %c1_25 = arith.constant 1 : index
    %c2_26 = arith.constant 2 : index
    %49 = memref.load %arg1[%c1_25, %c2_26] : memref<2x7xf32, #tpu.memory_space<smem>>
    %c1_i32_27 = arith.constant 1 : i32
    %50 = tpu.dynamic_rotate %5 by %c1_i32_27 dim 1 : vector<2x128xf32>, i32 -> vector<2x128xf32>
    %51 = vector.broadcast %49 : f32 to vector<2x128xf32>
    %52 = arith.mulf %51, %50 : vector<2x128xf32>
    %53 = arith.addf %48, %52 : vector<2x128xf32>
    %c1_i32_28 = arith.constant 1 : i32
    %54 = vector.broadcast %c1_i32_28 : i32 to vector<2x128xi32>
    %55 = arith.cmpi sge, %6, %54 : vector<2x128xi32>
    %cst_29 = arith.constant 0.000000e+00 : f32
    %56 = vector.broadcast %cst_29 : f32 to vector<2x128xf32>
    %57 = arith.select %55, %53, %56 : vector<2x128xi1>, vector<2x128xf32>
    %58 = arith.addf %44, %57 : vector<2x128xf32>
    %c0_30 = arith.constant 0 : index
    %c4 = arith.constant 4 : index
    %59 = memref.load %arg1[%c0_30, %c4] : memref<2x7xf32, #tpu.memory_space<smem>>
    %c127_i32 = arith.constant 127 : i32
    %60 = tpu.dynamic_rotate %1 by %c127_i32 dim 1 : vector<2x128xf32>, i32 -> vector<2x128xf32>
    %61 = vector.broadcast %59 : f32 to vector<2x128xf32>
    %62 = arith.mulf %61, %60 : vector<2x128xf32>
    %c1_31 = arith.constant 1 : index
    %c4_32 = arith.constant 4 : index
    %63 = memref.load %arg1[%c1_31, %c4_32] : memref<2x7xf32, #tpu.memory_space<smem>>
    %c127_i32_33 = arith.constant 127 : i32
    %64 = tpu.dynamic_rotate %5 by %c127_i32_33 dim 1 : vector<2x128xf32>, i32 -> vector<2x128xf32>
    %65 = vector.broadcast %63 : f32 to vector<2x128xf32>
    %66 = arith.mulf %65, %64 : vector<2x128xf32>
    %67 = arith.addf %62, %66 : vector<2x128xf32>
    %c127_i32_34 = arith.constant 127 : i32
    %68 = vector.broadcast %c127_i32_34 : i32 to vector<2x128xi32>
    %69 = arith.cmpi slt, %6, %68 : vector<2x128xi32>
    %cst_35 = arith.constant 0.000000e+00 : f32
    %70 = vector.broadcast %cst_35 : f32 to vector<2x128xf32>
    %71 = arith.select %69, %67, %70 : vector<2x128xi1>, vector<2x128xf32>
    %72 = arith.addf %58, %71 : vector<2x128xf32>
    %c0_36 = arith.constant 0 : index
    %c5 = arith.constant 5 : index
    %73 = memref.load %arg1[%c0_36, %c5] : memref<2x7xf32, #tpu.memory_space<smem>>
    %c126_i32 = arith.constant 126 : i32
    %74 = tpu.dynamic_rotate %1 by %c126_i32 dim 1 : vector<2x128xf32>, i32 -> vector<2x128xf32>
    %75 = vector.broadcast %73 : f32 to vector<2x128xf32>
    %76 = arith.mulf %75, %74 : vector<2x128xf32>
    %c1_37 = arith.constant 1 : index
    %c5_38 = arith.constant 5 : index
    %77 = memref.load %arg1[%c1_37, %c5_38] : memref<2x7xf32, #tpu.memory_space<smem>>
    %c126_i32_39 = arith.constant 126 : i32
    %78 = tpu.dynamic_rotate %5 by %c126_i32_39 dim 1 : vector<2x128xf32>, i32 -> vector<2x128xf32>
    %79 = vector.broadcast %77 : f32 to vector<2x128xf32>
    %80 = arith.mulf %79, %78 : vector<2x128xf32>
    %81 = arith.addf %76, %80 : vector<2x128xf32>
    %c126_i32_40 = arith.constant 126 : i32
    %82 = vector.broadcast %c126_i32_40 : i32 to vector<2x128xi32>
    %83 = arith.cmpi slt, %6, %82 : vector<2x128xi32>
    %cst_41 = arith.constant 0.000000e+00 : f32
    %84 = vector.broadcast %cst_41 : f32 to vector<2x128xf32>
    %85 = arith.select %83, %81, %84 : vector<2x128xi1>, vector<2x128xf32>
    %86 = arith.addf %72, %85 : vector<2x128xf32>
    %c0_42 = arith.constant 0 : index
    %c6 = arith.constant 6 : index
    %87 = memref.load %arg1[%c0_42, %c6] : memref<2x7xf32, #tpu.memory_space<smem>>
    %c125_i32 = arith.constant 125 : i32
    %88 = tpu.dynamic_rotate %1 by %c125_i32 dim 1 : vector<2x128xf32>, i32 -> vector<2x128xf32>
    %89 = vector.broadcast %87 : f32 to vector<2x128xf32>
    %90 = arith.mulf %89, %88 : vector<2x128xf32>
    %c1_43 = arith.constant 1 : index
    %c6_44 = arith.constant 6 : index
    %91 = memref.load %arg1[%c1_43, %c6_44] : memref<2x7xf32, #tpu.memory_space<smem>>
    %c125_i32_45 = arith.constant 125 : i32
    %92 = tpu.dynamic_rotate %5 by %c125_i32_45 dim 1 : vector<2x128xf32>, i32 -> vector<2x128xf32>
    %93 = vector.broadcast %91 : f32 to vector<2x128xf32>
    %94 = arith.mulf %93, %92 : vector<2x128xf32>
    %95 = arith.addf %90, %94 : vector<2x128xf32>
    %c125_i32_46 = arith.constant 125 : i32
    %96 = vector.broadcast %c125_i32_46 : i32 to vector<2x128xi32>
    %97 = arith.cmpi slt, %6, %96 : vector<2x128xi32>
    %cst_47 = arith.constant 0.000000e+00 : f32
    %98 = vector.broadcast %cst_47 : f32 to vector<2x128xf32>
    %99 = arith.select %97, %95, %98 : vector<2x128xi1>, vector<2x128xf32>
    %100 = arith.addf %86, %99 : vector<2x128xf32>
    %101 = arith.negf %100 : vector<2x128xf32>
    %102 = math.exp %101 : vector<2x128xf32>
    %cst_48 = arith.constant 1.000000e+00 : f32
    %103 = vector.broadcast %cst_48 : f32 to vector<2x128xf32>
    %104 = arith.addf %103, %102 : vector<2x128xf32>
    %105 = arith.divf %103, %104 : vector<2x128xf32>
    %c0_49 = arith.constant 0 : index
    %c0_50 = arith.constant 0 : index
    %106 = vector.load %arg4[%c0_49, %c0_50] : memref<2x128xf32, #tpu.memory_space<vmem>>, vector<2x128xf32>
    tpu.vector_store %arg4[%c0_49, %c0_50], %105 {strides = array<i32>} : memref<2x128xf32, #tpu.memory_space<vmem>>, vector<2x128xf32>,
    return
  }
  func.func @transform_0(%arg0: i32) -> (i32, i32) {
    %c0_i32 = arith.constant 0 : i32
    %c0_i32_0 = arith.constant 0 : i32
    %c0_i32_1 = arith.constant 0 : i32
    return %c0_i32, %c0_i32_0 : i32, i32
  }
  func.func @transform_1(%arg0: i32) -> i32 {
    %c0_i32 = arith.constant 0 : i32
    %c0_i32_0 = arith.constant 0 : i32
    return %c0_i32 : i32
  }
  func.func @transform_2(%arg0: i32) -> (i32, i32, i32) {
    %c0_i32 = arith.constant 0 : i32
    %c0_i32_0 = arith.constant 0 : i32
    %c0_i32_1 = arith.constant 0 : i32
    return %arg0, %c0_i32, %c0_i32_0 : i32, i32, i32
  }
  func.func @transform_3(%arg0: i32) -> (i32, i32) {
    %c0_i32 = arith.constant 0 : i32
    %c0_i32_0 = arith.constant 0 : i32
    return %arg0, %c0_i32 : i32, i32
  }
}

</mosaic_0001>

<llo_original>
// kernel: tpu_custom_call.1
$region0: #{tpu_custom_call.1}
  #allocation0 [shape = 'u32[]', space=smem, size = 0x4, offset = 0x4, fixed_abs, tag = 'smem constant byte address 0x4 - core index']
  #allocation1 [shape = 'u32[72,128]{1,0:T(1,128)}', space=vmem, size = 0x9000, scoped, tag = 'internal scratch']
  #allocation2 [shape = 'f32[1]{0:T(128)S(6)}', space=smem, size = 0x200, scoped, tag = 'scoped memory for tpu_custom_call.1']
  %s0 = inlined_call_operand.vmem [shape: f32[2,7], index: 0, kind: input, shape index: {}]
  %s1 = inlined_call_operand.<no memory space> [shape: f32[1], index: 1, kind: input, shape index: {}]
  %s2 = inlined_call_operand.hbm [shape: f32[2,4,128], index: 2, kind: input, shape index: {}]
  %s3 = inlined_call_operand.hbm [shape: f32[2,128], index: 3, kind: output, shape index: {}]
  %s4 = sld [smem:[#allocation0]]
  $region30: #{tpu_custom_call.1} parent=0
    _
  %s6 = ssub.s32 1, %s4
  %s7 = scalar_select 0, %s6, %s4
  %8 = sst [smem:[#allocation2]] %s1
  $region1: #{tpu_custom_call.1} parent=0
    #allocation3 [shape = 'u8[1024]{0}', space=smem, size = 0x400, scoped, tag = 'input window, operand 0, single buffered']
    #allocation4 [shape = 's32[1]{0}', space=sflag, size = 0x4, scoped, tag = 'scoped memory for tpu_custom_call.1']
    #allocation5 [shape = 's32[1]{0}', space=sflag, size = 0x4, scoped, tag = 'scoped memory for tpu_custom_call.1']
    #allocation6 [shape = 's32[1]{0}', space=sflag, size = 0x4, scoped, tag = 'scoped memory for tpu_custom_call.1']
    #allocation7 [shape = 'u8[4096]{0}', space=vmem, size = 0x1000, scoped, tag = 'input window, operand 2, single buffered']
    #allocation8 [shape = 'u8[1024]{0}', space=vmem, size = 0x400, scoped, tag = 'output window, operand 0, single buffered']
    %9 = vsyncpa [#allocation6], 0
    %10 = vsyncpa [#allocation4], 0
    %11 = vsyncpa [#allocation5], 0
    // Predicated region
    $region2: #{tpu_custom_call.1} parent=1 // pred_check
      _
    $region3: #{tpu_custom_call.1} parent=1 // pred_check_branch
      %13 = sbr.rel (0) target = $region5
    $region4: #{tpu_custom_call.1} parent=1 // pred_region
      %15 = vsyncadd [#allocation6], 0
      %s17 = sshll.u32 %s0, 4
      %s18 = int_to_ptr.vmem [resolvable:$true] %s17
      %20 = dma.vmem_to_smem %s18, 32, [#allocation3], [#allocation6]
    $region5: #{tpu_custom_call.1} parent=1 // pred_fallthru
      _
    // Predicated region
    $region6: #{tpu_custom_call.1} parent=1 // pred_check
      _
    $region7: #{tpu_custom_call.1} parent=1 // pred_check_branch
      %22 = sbr.rel (0) target = $region9
    $region8: #{tpu_custom_call.1} parent=1 // pred_region
      _
    $region9: #{tpu_custom_call.1} parent=1 // pred_fallthru
      _
    // Predicated region
    $region10: #{tpu_custom_call.1} parent=1 // pred_check
      _
    $region11: #{tpu_custom_call.1} parent=1 // pred_check_branch
      %24 = sbr.rel (0) target = $region13
    $region12: #{tpu_custom_call.1} parent=1 // pred_region
      %26 = vsyncadd [#allocation4], 0
      %s27 = sshll.u32 %s2, 4
      %s28 = int_to_ptr.hbm [resolvable:$true] %s27
      %s29 = sshll.u32 [#allocation7], 4
      %s30 = int_to_ptr.vmem [resolvable:$true] %s29
      %35 = dma.hbm_to_vmem [thread:$0]  %s28, 128, %s30, [#allocation4], 64, 64, 4
    $region13: #{tpu_custom_call.1} parent=1 // pred_fallthru
      _
    // Predicated region
    $region14: #{tpu_custom_call.1} parent=1 // pred_check
      _
    $region15: #{tpu_custom_call.1} parent=1 // pred_check_branch
      %37 = sbr.rel (0) target = $region17
    $region16: #{tpu_custom_call.1} parent=1 // pred_region
      %39 = dma.done [#allocation6], 32
    $region17: #{tpu_custom_call.1} parent=1 // pred_fallthru
      _
    // Predicated region
    $region18: #{tpu_custom_call.1} parent=1 // pred_check
      _
    $region19: #{tpu_custom_call.1} parent=1 // pred_check_branch
      %41 = sbr.rel (0) target = $region21
    $region20: #{tpu_custom_call.1} parent=1 // pred_region
      %43 = dma.done [#allocation4], 128
    $region21: #{tpu_custom_call.1} parent=1 // pred_fallthru
      _
    %44 = sfence
    %v45 = vld [vmem:[#allocation7] sm:$0xf]
    %v46 = vld [vmem:[#allocation7 + $0x4] sm:$0xf]
    %vm47 = vcmask 1043456
    %v48 = vsel %vm47, %v45, -inf
    %v49 = vrot.slane %v48, 4
    %v50 = vmax.f32 %v48, %v49
    %v51 = vrot.slane %v50, 2
    %v52 = vmax.f32 %v50, %v51
    %v53 = vrot.slane %v52, 1
    %v54 = vmax.f32 %v52, %v53
    %v55 = vsel %vm47, %v46, -inf
    %v56 = vrot.slane %v55, 4
    %v57 = vmax.f32 %v55, %v56
    %v58 = vrot.slane %v57, 2
    %v59 = vmax.f32 %v57, %v58
    %v60 = vrot.slane %v59, 1
    %v61 = vmax.f32 %v59, %v60
    %v62 = vsel %vm47, %v45, 0.0
    %v63 = vrot.slane %v62, 4
    %v64 = vadd.f32 %v62, %v63
    %v65 = vrot.slane %v64, 2
    %v66 = vadd.f32 %v64, %v65
    %v67 = vrot.slane %v66, 1
    %v68 = vadd.f32 %v66, %v67
    %v69 = vsel %vm47, %v46, 0.0
    %v70 = vrot.slane %v69, 4
    %v71 = vadd.f32 %v69, %v70
    %v72 = vrot.slane %v71, 2
    %v73 = vadd.f32 %v71, %v72
    %v74 = vrot.slane %v73, 1
    %v75 = vadd.f32 %v73, %v74
    %v76 = vrcp.pop 4.0
    %v77 = vmul.f32 4.0, %v76
    %v78 = vsub.f32 1.0, %v77
    %v79 = vmul.f32 %v76, %v78
    %v80 = vadd.f32 %v76, %v79
    %vm81 = vweird.f32 %v76
    %v82 = vsel %vm81, %v76, %v80
    %v83 = vmul.f32 %v68, %v82
    %v84 = vmul.f32 %v75, %v82
    %v85 = vlaneseq
    %v86 = vand.u32 %v85, 127
    %s87 = sld [smem:[#allocation3 + $0x3]]
    %v88 = vstv %s87
    %v89 = vmul.f32 %v88, %v54
    %v90 = vmul.f32 %v88, %v61
    %s91 = sld [smem:[#allocation3 + $0x83]]
    %v92 = vstv %s91
    %v93 = vmul.f32 %v92, %v83
    %v94 = vmul.f32 %v92, %v84
    %v95 = vadd.f32 %v89, %v93
    %v96 = vadd.f32 %v90, %v94
    %s97 = sld [smem:[#allocation2]]
    %v98 = vstv %s97
    %v99 = vadd.f32 %v95, %v98
    %v100 = vadd.f32 %v96, %v98
    %s101 = sld [smem:[#allocation3]]
    %vm104 = vcmask 1041409
    %v105 = vsel %vm104, %v61, %v54
    %107 = vrot.lane.b32.xlu0 %v105, 3
    %v108 = vpop.permute.xlu0 %107
    %v109 = vstv %s101
    %v110 = vmul.f32 %v109, %v108
    %s111 = sld [smem:[#allocation3 + $0x80]]
    %v114 = vsel %vm104, %v84, %v83
    %116 = vrot.lane.b32.xlu0 %v114, 3
    %v117 = vpop.permute.xlu0 %116
    %v118 = vstv %s111
    %v119 = vmul.f32 %v118, %v117
    %v120 = vadd.f32 %v110, %v119
    %vm121 = vcmp.ge.s32.totalorder %v86, 3
    %v122 = vsel %vm121, %v120, 0.0
    %v124 = vrot.slane %v122, 1
    %v127 = vadd.f32 %v99, %v122
    %v128 = vadd.f32 %v100, %v124
    %s129 = sld [smem:[#allocation3 + $0x1]]
    %130 = vrot.lane.b32.xlu0 %v105, 2
    %v131 = vpop.permute.xlu0 %130
    %v132 = vstv %s129
    %v133 = vmul.f32 %v132, %v131
    %s134 = sld [smem:[#allocation3 + $0x81]]
    %135 = vrot.lane.b32.xlu0 %v114, 2
    %v136 = vpop.permute.xlu0 %135
    %v137 = vstv %s134
    %v138 = vmul.f32 %v137, %v136
    %v139 = vadd.f32 %v133, %v138
    %vm140 = vcmp.ge.s32.totalorder %v86, 2
    %v141 = vsel %vm140, %v139, 0.0
    %v143 = vrot.slane %v141, 1
    %v146 = vadd.f32 %v127, %v141
    %v147 = vadd.f32 %v128, %v143
    %s148 = sld [smem:[#allocation3 + $0x2]]
    %149 = vrot.lane.b32.xlu0 %v105, 1
    %v150 = vpop.permute.xlu0 %149
    %v151 = vstv %s148
    %v152 = vmul.f32 %v151, %v150
    %s153 = sld [smem:[#allocation3 + $0x82]]
    %154 = vrot.lane.b32.xlu0 %v114, 1
    %v155 = vpop.permute.xlu0 %154
    %v156 = vstv %s153
    %v157 = vmul.f32 %v156, %v155
    %v158 = vadd.f32 %v152, %v157
    %vm159 = vcmp.ge.s32.totalorder %v86, 1
    %v160 = vsel %vm159, %v158, 0.0
    %v162 = vrot.slane %v160, 1
    %v165 = vadd.f32 %v146, %v160
    %v166 = vadd.f32 %v147, %v162
    %s167 = sld [smem:[#allocation3 + $0x4]]
    %168 = vrot.lane.b32.xlu0 %v105, 127
    %v169 = vpop.permute.xlu0 %168
    %v170 = vstv %s167
    %v171 = vmul.f32 %v170, %v169
    %s172 = sld [smem:[#allocation3 + $0x84]]
    %173 = vrot.lane.b32.xlu0 %v114, 127
    %v174 = vpop.permute.xlu0 %173
    %v175 = vstv %s172
    %v176 = vmul.f32 %v175, %v174
    %v177 = vadd.f32 %v171, %v176
    %vm178 = vcmp.lt.s32.totalorder %v86, 127
    %v179 = vsel %vm178, %v177, 0.0
    %v181 = vrot.slane %v179, 1
    %v184 = vadd.f32 %v165, %v179
    %v185 = vadd.f32 %v166, %v181
    %s186 = sld [smem:[#allocation3 + $0x5]]
    %187 = vrot.lane.b32.xlu0 %v105, 126
    %v188 = vpop.permute.xlu0 %187
    %v189 = vstv %s186
    %v190 = vmul.f32 %v189, %v188
    %s191 = sld [smem:[#allocation3 + $0x85]]
    %192 = vrot.lane.b32.xlu0 %v114, 126
    %v193 = vpop.permute.xlu0 %192
    %v194 = vstv %s191
    %v195 = vmul.f32 %v194, %v193
    %v196 = vadd.f32 %v190, %v195
    %vm197 = vcmp.lt.s32.totalorder %v86, 126
    %v198 = vsel %vm197, %v196, 0.0
    %v200 = vrot.slane %v198, 1
    %v203 = vadd.f32 %v184, %v198
    %v204 = vadd.f32 %v185, %v200
    %s205 = sld [smem:[#allocation3 + $0x6]]
    %206 = vrot.lane.b32.xlu0 %v105, 125
    %v207 = vpop.permute.xlu0 %206
    %v208 = vstv %s205
    %v209 = vmul.f32 %v208, %v207
    %s210 = sld [smem:[#allocation3 + $0x86]]
    %211 = vrot.lane.b32.xlu0 %v114, 125
    %v212 = vpop.permute.xlu0 %211
    %v213 = vstv %s210
    %v214 = vmul.f32 %v213, %v212
    %v215 = vadd.f32 %v209, %v214
    %vm216 = vcmp.lt.s32.totalorder %v86, 125
    %v217 = vsel %vm216, %v215, 0.0
    %v219 = vrot.slane %v217, 1
    %v222 = vadd.f32 %v203, %v217
    %v223 = vadd.f32 %v204, %v219
    %v224 = vxor.u32 %v222, 2147483648
    %v225 = vxor.u32 %v223, 2147483648
    %v226 = vmul.f32 %v224, 1.442695
    %v227 = vpow.pop %v226
    %v228 = vmul.f32 %v225, 1.442695
    %v229 = vpow.pop %v228
    %v230 = vadd.f32 %v227, 1.0
    %v231 = vadd.f32 %v229, 1.0
    %v232 = vrcp.pop %v230
    %v233 = vmul.f32 %v230, %v232
    %v234 = vsub.f32 1.0, %v233
    %v235 = vmul.f32 %v232, %v234
    %v236 = vadd.f32 %v232, %v235
    %vm237 = vweird.f32 %v230
    %vm238 = vweird.f32 %v232
    %vm239 = vmor %vm237, %vm238
    %v240 = vsel %vm239, %v232, %v236
    %v241 = vand.u32 2147483647, %v230
    %vm242 = vcmp.eq.f32.partialorder %v241, 8.507059e+37
    %v243 = vand.u32 %v230, 2147483648
    %v244 = vor.u32 1.1754944e-38, %v243
    %v245 = vsel %vm242, %v244, %v240
    %v246 = vmul.f32 1.0, %v245
    %v247 = vrcp.pop %v231
    %v248 = vmul.f32 %v231, %v247
    %v249 = vsub.f32 1.0, %v248
    %v250 = vmul.f32 %v247, %v249
    %v251 = vadd.f32 %v247, %v250
    %vm252 = vweird.f32 %v231
    %vm253 = vweird.f32 %v247
    %vm254 = vmor %vm252, %vm253
    %v255 = vsel %vm254, %v247, %v251
    %v256 = vand.u32 2147483647, %v231
    %vm257 = vcmp.eq.f32.partialorder %v256, 8.507059e+37
    %v258 = vand.u32 %v231, 2147483648
    %v259 = vor.u32 1.1754944e-38, %v258
    %v260 = vsel %vm257, %v259, %v255
    %v261 = vmul.f32 1.0, %v260
    %v264 = vrot.slane %v261, 7
    %v265 = vsel %vm104, %v264, %v246
    %267 = vst [vmem:[#allocation8] sm:$0x3] %v265
    // Predicated region
    $region22: #{tpu_custom_call.1} parent=1 // pred_check
      _
    $region23: #{tpu_custom_call.1} parent=1 // pred_check_branch
      %269 = sbr.rel (0) target = $region25
    $region24: #{tpu_custom_call.1} parent=1 // pred_region
      %271 = vsyncadd [#allocation5], 0
      %s273 = sshll.u32 [#allocation8], 4
      %s274 = int_to_ptr.vmem [resolvable:$true] %s273
      %s275 = sshll.u32 %s3, 4
      %s276 = int_to_ptr.hbm [resolvable:$true] %s275
      %278 = dma.vmem_to_hbm [thread:$0]  %s274, 32, %s276, [#allocation5]
    $region25: #{tpu_custom_call.1} parent=1 // pred_fallthru
      _
    // Predicated region
    $region26: #{tpu_custom_call.1} parent=1 // pred_check
      _
    $region27: #{tpu_custom_call.1} parent=1 // pred_check_branch
      %280 = sbr.rel (0) target = $region29
    $region28: #{tpu_custom_call.1} parent=1 // pred_region
      %282 = dma.done [#allocation5], 32
    $region29: #{tpu_custom_call.1} parent=1 // pred_fallthru
      _
    %283 = vsyncpa [#allocation4], 1
    %284 = vsyncpa [#allocation5], 1
    %285 = vsyncpa [#allocation6], 1

</llo_original>
